<compile_context>
chip_gen: v6e
topology: v6e:2x2x1
jax: 0.10.0
libtpu: 0.0.40
codegen_flags: <defaults>
</compile_context>

<pallas_src>
import functools

import jax
import jax.numpy as jnp
from jax.experimental import pallas as pl
from jax.experimental.pallas import tpu as pltpu


_ROW_TILE = 512                         # rows per grid step
_LANE_CANDIDATES = (1024, 512, 256, 128)
_VMEM_LIMIT = 32 * 1024 * 1024          # safe on v5e (128M), v6e (128M), v7x (64M)


def _reduce_kernel(x_ref, m_ref, l_ref, m_sc, l_sc, *, n, tr, lane, needs_mask):
    """Pass 1: online global (max, rescaled exp-sum) across all row tiles."""
    i = pl.program_id(0)

    @pl.when(i == 0)
    def _init():
        m_sc[...] = jnp.full((1, 1), -jnp.inf, jnp.float32)
        l_sc[...] = jnp.zeros((1, 1), jnp.float32)

    x = x_ref[...].astype(jnp.float32)
    if needs_mask:
        # Mask the ragged tail with -inf: exp(-inf - m) == 0, max unaffected.
        r = jax.lax.broadcasted_iota(jnp.int32, x.shape, 0)
        c = jax.lax.broadcasted_iota(jnp.int32, x.shape, 1)
        flat_idx = (i * tr + r) * lane + c
        x = jnp.where(flat_idx < n, x, -jnp.inf)

    m_prev = m_sc[...]                                # (1, 1)
    l_prev = l_sc[...]                                # (1, 1)
    m_new = jnp.maximum(m_prev, jnp.max(x))           # (1, 1)
    corr = jnp.exp(m_prev - m_new)                    # (1, 1) EUP
    l_new = l_prev * corr + jnp.sum(jnp.exp(x - m_new))
    m_sc[...] = m_new
    l_sc[...] = l_new

    @pl.when(i == pl.num_programs(0) - 1)
    def _finalize():
        m_ref[...] = m_sc[...]
        l_ref[...] = l_sc[...]


def _normalize_kernel(m_ref, l_ref, x_ref, o_ref):
    """Pass 2: per-tile o = exp(x - m) * (1 / l)."""
    x = x_ref[...].astype(jnp.float32)
    m = m_ref[...]                                    # (1, 1)
    inv_l = pl.reciprocal(l_ref[...], approx=False)   # exact: keeps 1e-6 rtol
    o_ref[...] = (jnp.exp(x - m) * inv_l).astype(o_ref.dtype)


def _layout(n):
    """Pick a lane-dense 2D view (rows, lane) and a row-tile size."""
    lane = None
    for cand in _LANE_CANDIDATES:
        if n % cand == 0:
            lane = cand
            break
    if lane is None:                    # ragged: fall back, mask inside kernel
        lane = 512
    rows = -(-n // lane)                # ceil
    if rows <= _ROW_TILE:
        tr = rows                       # one row tile == full dim (legal block)
    else:
        tr = _ROW_TILE                  # multiple of 8 (legal block)
        rows = -(-rows // tr) * tr      # pad row count to a multiple of tr
    return lane, rows, tr


def softmax_stable(x):
    """Global numerically-stable softmax over ALL elements of x (any shape)."""
    orig_shape = x.shape
    orig_dtype = x.dtype
    n = x.size

    lane, rows, tr = _layout(n)
    padded_n = rows * lane
    needs_mask = padded_n != n
    num_tiles = rows // tr

    flat = x.reshape(-1)                       # free (contiguous) reshape
    if needs_mask:
        # Bounded (< one tile) zero pad only for the ragged fallback path;
        # correctness is handled by the in-kernel iota mask.
        flat = jnp.pad(flat, (0, padded_n - n))
    x2d = flat.reshape(rows, lane)

    reduce_kernel = functools.partial(
        _reduce_kernel, n=n, tr=tr, lane=lane, needs_mask=needs_mask)

    # Pass 1: global online reduction -> m (max), l (sum of exp(x - m)).
    m, l = pl.pallas_call(
        reduce_kernel,
        out_shape=(jax.ShapeDtypeStruct((1, 1), jnp.float32),
                   jax.ShapeDtypeStruct((1, 1), jnp.float32)),
        grid=(num_tiles,),
        in_specs=[pl.BlockSpec((tr, lane), lambda i: (i, 0))],
        out_specs=(pl.BlockSpec((1, 1), lambda i: (0, 0)),
                   pl.BlockSpec((1, 1), lambda i: (0, 0))),
        scratch_shapes=[pltpu.VMEM((1, 1), jnp.float32),
                        pltpu.VMEM((1, 1), jnp.float32)],
        compiler_params=pltpu.CompilerParams(
            dimension_semantics=("arbitrary",),
            vmem_limit_bytes=_VMEM_LIMIT,
        ),
    )(x2d)

    # Pass 2: normalize each tile independently (parallel across TCs on v7x).
    out2d = pl.pallas_call(
        _normalize_kernel,
        out_shape=jax.ShapeDtypeStruct((rows, lane), orig_dtype),
        grid=(num_tiles,),
        in_specs=[pl.BlockSpec((1, 1), lambda i: (0, 0)),
                  pl.BlockSpec((1, 1), lambda i: (0, 0)),
                  pl.BlockSpec((tr, lane), lambda i: (i, 0))],
        out_specs=pl.BlockSpec((tr, lane), lambda i: (i, 0)),
        compiler_params=pltpu.CompilerParams(
            dimension_semantics=("parallel",),
            vmem_limit_bytes=_VMEM_LIMIT,
        ),
    )(m, l, x2d)

    if needs_mask:
        out = out2d.reshape(-1)[:n].reshape(orig_shape)
    else:
        out = out2d.reshape(orig_shape)
    return out


def _reference(x):
    x_max = jnp.max(x)
    e = jnp.exp(x - x_max)
    return e / jnp.sum(e)


if __name__ == "__main__":
    key = jax.random.PRNGKey(0)

    # Primary case: NCHW input consistent with the module (2, 4, 16, 16).
    x = jax.random.normal(key, (2, 4, 16, 16), dtype=jnp.float32)
    y = jax.block_until_ready(softmax_stable(x))
    ref = _reference(x)
    assert y.shape == x.shape and y.dtype == x.dtype
    assert jnp.allclose(y, ref, atol=1e-6, rtol=1e-6)
    assert jnp.allclose(jnp.sum(y), 1.0, atol=1e-5)

    # Larger case: exercises the multi-tile online-reduction grid path.
    k1, k2 = jax.random.split(key)
    xb = jax.random.normal(k1, (4, 8, 256, 256), dtype=jnp.float32)
    yb = jax.block_until_ready(softmax_stable(xb))
    assert jnp.allclose(yb, _reference(xb), atol=1e-6, rtol=1e-6)

    # Ragged case: exercises the in-kernel tail-masking fallback path.
    xr = jax.random.normal(k2, (2, 3, 17, 19), dtype=jnp.float32)
    yr = jax.block_until_ready(softmax_stable(xr))
    assert jnp.allclose(yr, _reference(xr), atol=1e-6, rtol=1e-6)

    print("KERNEL_OK")
</pallas_src>

<mosaic_0001>
module attributes {stable_mosaic.version = 11 : i64} {
  func.func @_reduce_kernel(%arg0: i32, %arg1: memref<2x1024xf32, #tpu.memory_space<vmem>>, %arg2: memref<1x1xf32, #tpu.memory_space<vmem>>, %arg3: memref<1x1xf32, #tpu.memory_space<vmem>>, %arg4: memref<1x1xf32, #tpu.memory_space<vmem>>, %arg5: memref<1x1xf32, #tpu.memory_space<vmem>>) attributes {dimension_semantics = [#tpu.dimension_semantics<arbitrary>], iteration_bounds = array<i64: 1>, scalar_prefetch = 0 : i64, scratch_operands = 2 : i64, tpu.core_type = #tpu.core_type<tc>, window_params = [{transform_indices = @transform_0, window_bounds = array<i64: 2, 1024>}, {pipeline_mode = #tpu.pipeline_mode<synchronous>, transform_indices = @transform_1, window_bounds = array<i64: 1, 1>}, {pipeline_mode = #tpu.pipeline_mode<synchronous>, transform_indices = @transform_2, window_bounds = array<i64: 1, 1>}]} {
    %c0_i32 = arith.constant 0 : i32
    %0 = arith.cmpi eq, %arg0, %c0_i32 : i32
    %1 = arith.extui %0 : i1 to i32
    %c0_i32_0 = arith.constant 0 : i32
    %2 = arith.cmpi ne, %1, %c0_i32_0 : i32
    scf.if %2 {
      %cst_13 = arith.constant 0xFF800000 : f32
      %29 = vector.broadcast %cst_13 : f32 to vector<1x1xf32>
      %c0_14 = arith.constant 0 : index
      %c0_15 = arith.constant 0 : index
      %30 = vector.load %arg4[%c0_14, %c0_15] : memref<1x1xf32, #tpu.memory_space<vmem>>, vector<1x1xf32>
      tpu.vector_store %arg4[%c0_14, %c0_15], %29 {strides = array<i32>} : memref<1x1xf32, #tpu.memory_space<vmem>>, vector<1x1xf32>,
      %cst_16 = arith.constant 0.000000e+00 : f32
      %31 = vector.broadcast %cst_16 : f32 to vector<1x1xf32>
      %c0_17 = arith.constant 0 : index
      %c0_18 = arith.constant 0 : index
      %32 = vector.load %arg5[%c0_17, %c0_18] : memref<1x1xf32, #tpu.memory_space<vmem>>, vector<1x1xf32>
      tpu.vector_store %arg5[%c0_17, %c0_18], %31 {strides = array<i32>} : memref<1x1xf32, #tpu.memory_space<vmem>>, vector<1x1xf32>,
    } else {
    }
    %c0 = arith.constant 0 : index
    %c0_1 = arith.constant 0 : index
    %3 = vector.load %arg1[%c0, %c0_1] : memref<2x1024xf32, #tpu.memory_space<vmem>>, vector<2x1024xf32>
    %c0_2 = arith.constant 0 : index
    %c0_3 = arith.constant 0 : index
    %4 = vector.load %arg4[%c0_2, %c0_3] : memref<1x1xf32, #tpu.memory_space<vmem>>, vector<1x1xf32>
    %c0_4 = arith.constant 0 : index
    %c0_5 = arith.constant 0 : index
    %5 = vector.load %arg5[%c0_4, %c0_5] : memref<1x1xf32, #tpu.memory_space<vmem>>, vector<1x1xf32>
    %6 = vector.shape_cast %3 : vector<2x1024xf32> to vector<1x2x1024xf32>
    %cst = arith.constant dense<0xFF800000> : vector<1xf32>
    %7 = vector.multi_reduction <maximumf>, %6, %cst [1, 2] : vector<1x2x1024xf32> to vector<1xf32>
    %8 = vector.shape_cast %7 : vector<1xf32> to vector<1x1x1xf32>
    %9 = vector.extract %8[0, 0, 0] : f32 from vector<1x1x1xf32>
    %10 = vector.broadcast %9 : f32 to vector<1x1xf32>
    %11 = arith.maximumf %4, %10 : vector<1x1xf32>
    %12 = arith.subf %4, %11 : vector<1x1xf32>
    %13 = math.exp %12 : vector<1x1xf32>
    %14 = arith.mulf %5, %13 : vector<1x1xf32>
    %15 = vector.broadcast %11 : vector<1x1xf32> to vector<2x1024xf32>
    %16 = arith.subf %3, %15 : vector<2x1024xf32>
    %17 = math.exp %16 : vector<2x1024xf32>
    %18 = vector.shape_cast %17 : vector<2x1024xf32> to vector<1x2x1024xf32>
    %cst_6 = arith.constant dense<0.000000e+00> : vector<1xf32>
    %19 = vector.multi_reduction <add>, %18, %cst_6 [1, 2] : vector<1x2x1024xf32> to vector<1xf32>
    %20 = vector.shape_cast %19 : vector<1xf32> to vector<1x1x1xf32>
    %21 = vector.extract %20[0, 0, 0] : f32 from vector<1x1x1xf32>
    %22 = vector.broadcast %21 : f32 to vector<1x1xf32>
    %23 = arith.addf %14, %22 : vector<1x1xf32>
    %c0_7 = arith.constant 0 : index
    %c0_8 = arith.constant 0 : index
    %24 = vector.load %arg4[%c0_7, %c0_8] : memref<1x1xf32, #tpu.memory_space<vmem>>, vector<1x1xf32>
    tpu.vector_store %arg4[%c0_7, %c0_8], %11 {strides = array<i32>} : memref<1x1xf32, #tpu.memory_space<vmem>>, vector<1x1xf32>,
    %c0_9 = arith.constant 0 : index
    %c0_10 = arith.constant 0 : index
    %25 = vector.load %arg5[%c0_9, %c0_10] : memref<1x1xf32, #tpu.memory_space<vmem>>, vector<1x1xf32>
    tpu.vector_store %arg5[%c0_9, %c0_10], %23 {strides = array<i32>} : memref<1x1xf32, #tpu.memory_space<vmem>>, vector<1x1xf32>,
    %c0_i32_11 = arith.constant 0 : i32
    %26 = arith.cmpi eq, %arg0, %c0_i32_11 : i32
    %27 = arith.extui %26 : i1 to i32
    %c0_i32_12 = arith.constant 0 : i32
    %28 = arith.cmpi ne, %27, %c0_i32_12 : i32
    scf.if %28 {
      %c0_13 = arith.constant 0 : index
      %c0_14 = arith.constant 0 : index
      %29 = vector.load %arg4[%c0_13, %c0_14] : memref<1x1xf32, #tpu.memory_space<vmem>>, vector<1x1xf32>
      %c0_15 = arith.constant 0 : index
      %c0_16 = arith.constant 0 : index
      %30 = vector.load %arg2[%c0_15, %c0_16] : memref<1x1xf32, #tpu.memory_space<vmem>>, vector<1x1xf32>
      tpu.vector_store %arg2[%c0_15, %c0_16], %29 {strides = array<i32>} : memref<1x1xf32, #tpu.memory_space<vmem>>, vector<1x1xf32>,
      %c0_17 = arith.constant 0 : index
      %c0_18 = arith.constant 0 : index
      %31 = vector.load %arg5[%c0_17, %c0_18] : memref<1x1xf32, #tpu.memory_space<vmem>>, vector<1x1xf32>
      %c0_19 = arith.constant 0 : index
      %c0_20 = arith.constant 0 : index
      %32 = vector.load %arg3[%c0_19, %c0_20] : memref<1x1xf32, #tpu.memory_space<vmem>>, vector<1x1xf32>
      tpu.vector_store %arg3[%c0_19, %c0_20], %31 {strides = array<i32>} : memref<1x1xf32, #tpu.memory_space<vmem>>, vector<1x1xf32>,
    } else {
    }
    return
  }
  func.func @transform_0(%arg0: i32) -> (i32, i32) {
    %c0_i32 = arith.constant 0 : i32
    %c0_i32_0 = arith.constant 0 : i32
    return %arg0, %c0_i32 : i32, i32
  }
  func.func @transform_1(%arg0: i32) -> (i32, i32) {
    %c0_i32 = arith.constant 0 : i32
    %c0_i32_0 = arith.constant 0 : i32
    %c0_i32_1 = arith.constant 0 : i32
    return %c0_i32, %c0_i32_0 : i32, i32
  }
  func.func @transform_2(%arg0: i32) -> (i32, i32) {
    %c0_i32 = arith.constant 0 : i32
    %c0_i32_0 = arith.constant 0 : i32
    %c0_i32_1 = arith.constant 0 : i32
    return %c0_i32, %c0_i32_0 : i32, i32
  }
}

</mosaic_0001>

<llo_original>
// kernel: tpu_custom_call.1
$region0: #{tpu_custom_call.1}
  #allocation0 [shape = 'u32[]', space=smem, size = 0x4, offset = 0x4, fixed_abs, tag = 'smem constant byte address 0x4 - core index']
  #allocation1 [shape = 'u32[144,128]{1,0:T(1,128)}', space=vmem, size = 0x12000, scoped, tag = 'internal scratch']
  #allocation2 [shape = 'f32[1,1]{1,0:T(1,128)}', space=vmem, size = 0x200, scoped, tag = 'scratch operand']
  #allocation3 [shape = 'f32[1,1]{1,0:T(1,128)}', space=vmem, size = 0x200, scoped, tag = 'scratch operand']
  %s0 = inlined_call_operand.hbm [shape: f32[2,1024], index: 0, kind: input, shape index: {}]
  %s1 = inlined_call_operand.hbm [shape: f32[1,1], index: 1, kind: output, shape index: {0}]
  %s2 = inlined_call_operand.hbm [shape: f32[1,1], index: 2, kind: output, shape index: {1}]
  %3 = xla_tuple %s1, %s2
  %s4 = sld [smem:[#allocation0]]
  $region34: #{tpu_custom_call.1} parent=0
    _
  %s6 = ssub.s32 1, %s4
  %s7 = scalar_select 0, %s6, %s4
  $region1: #{tpu_custom_call.1} parent=0
    #allocation4 [shape = 'u8[8192]{0}', space=vmem, size = 0x2000, scoped, tag = 'input window, operand 0, single buffered']
    #allocation5 [shape = 's32[1]{0}', space=sflag, size = 0x4, scoped, tag = 'scoped memory for tpu_custom_call.1']
    #allocation6 [shape = 's32[1]{0}', space=sflag, size = 0x4, scoped, tag = 'scoped memory for tpu_custom_call.1']
    #allocation7 [shape = 'u8[512]{0}', space=vmem, size = 0x400, scoped, tag = 'output window, operand 0, single buffered']
    #allocation8 [shape = 'u8[512]{0}', space=vmem, size = 0x400, scoped, tag = 'output window, operand 1, single buffered']
    #allocation9 [shape = 's32[1]{0}', space=sflag, size = 0x4, scoped, tag = 'scoped memory for tpu_custom_call.1']
    %8 = vsyncpa [#allocation5], 0
    %9 = vsyncpa [#allocation6], 0
    %10 = vsyncpa [#allocation9], 0
    // Predicated region
    $region2: #{tpu_custom_call.1} parent=1 // pred_check
      _
    $region3: #{tpu_custom_call.1} parent=1 // pred_check_branch
      %12 = sbr.rel (0) target = $region5
    $region4: #{tpu_custom_call.1} parent=1 // pred_region
      %s14 = ssub.s32 256, 256
      %15 = vsyncadd [#allocation5], %s14
      %s17 = sshll.u32 [#allocation4], 4
      %s18 = int_to_ptr.vmem [resolvable:$true] %s17
      %20 = dma.hbm_to_vmem [thread:$0]  %s0, 256, %s18, [#allocation5]
    $region5: #{tpu_custom_call.1} parent=1 // pred_fallthru
      _
    // Predicated region
    $region6: #{tpu_custom_call.1} parent=1 // pred_check
      _
    $region7: #{tpu_custom_call.1} parent=1 // pred_check_branch
      %22 = sbr.rel (0) target = $region9
    $region8: #{tpu_custom_call.1} parent=1 // pred_region
      %23 = dma.done [#allocation5], 256
    $region9: #{tpu_custom_call.1} parent=1 // pred_fallthru
      _
    %p24 = scmp.eq.s32.totalorder 0, 0
    // Predicated region
    $region10: #{tpu_custom_call.1} parent=1 // pred_check
      %p25 = pneg %p24
    $region11: #{tpu_custom_call.1} parent=1 // pred_check_branch
      %27 = sbr.rel (%p25) target = $region13
    $region12: #{tpu_custom_call.1} parent=1 // pred_region
      %vm28 = vcmask 0
      %29 = vst.msk [vmem:[#allocation2] sm:$0x1] %vm28, -inf
      %30 = vst.msk [vmem:[#allocation3] sm:$0x1] %vm28, 0.0
    $region13: #{tpu_custom_call.1} parent=1 // pred_fallthru
      _
    %v31 = vld [vmem:[#allocation4] sm:$0xff]
    %v32 = vld [vmem:[#allocation4 + $0x8] sm:$0xff]
    %v33 = vld [vmem:[#allocation2] sm:$0x1]
    %v34 = vld [vmem:[#allocation3] sm:$0x1]
    %v37 = vcombine.high %v31, %v31
    %v39 = vunpack.c.l.s4 1983009808
    %v40 = vunpack.c.0.s8 %v39
    %v41 = vlaneseq
    %v42 = vshrl.u32 %v41, 7
    %v43 = vsub.s32 %v40, %v42
    %v44 = vrot.slane %v31, %v43
    %v46 = vunpack.c.l.s4 1983009808
    %v47 = vunpack.c.0.s8 %v46
    %v48 = vlaneseq
    %v49 = vshrl.u32 %v48, 7
    %v50 = vsub.s32 %v47, %v49
    %v51 = vrot.slane %v37, %v50
    %v52 = vcombine.high %v44, %v44
    %v53 = vcombine.high %v51, %v51
    %v54 = vcombine.high %v32, %v32
    %v56 = vunpack.c.l.s4 1983009808
    %v57 = vunpack.c.0.s8 %v56
    %v58 = vlaneseq
    %v59 = vshrl.u32 %v58, 7
    %v60 = vsub.s32 %v57, %v59
    %v61 = vrot.slane %v32, %v60
    %v63 = vunpack.c.l.s4 1983009808
    %v64 = vunpack.c.0.s8 %v63
    %v65 = vlaneseq
    %v66 = vshrl.u32 %v65, 7
    %v67 = vsub.s32 %v64, %v66
    %v68 = vrot.slane %v54, %v67
    %v69 = vcombine.high %v61, %v61
    %v70 = vcombine.high %v68, %v68
    %vm79 = vcmask 1041408
    %v80 = vsel %vm79, %v44, -inf
    %v81 = vsel %vm79, %v52, -inf
    %v82 = vsel %vm79, %v51, -inf
    %v83 = vsel %vm79, %v53, -inf
    %v84 = vsel %vm79, %v61, -inf
    %v85 = vmax.f32 %v80, %v84
    %v86 = vsel %vm79, %v69, -inf
    %v87 = vmax.f32 %v81, %v86
    %v88 = vsel %vm79, %v68, -inf
    %v89 = vmax.f32 %v82, %v88
    %v90 = vsel %vm79, %v70, -inf
    %v91 = vmax.f32 %v83, %v90
    %v92 = vmax.f32 %v85, %v87
    %v93 = vmax.f32 %v89, %v91
    %v94 = vmax.f32 %v92, %v93
    %95 = vmax.xlane.f32.xlu0 %v94
    %v96 = vpop.xlane.xlu0 %95
    %v97 = vrot.slane %v96, 4
    %v98 = vmax.f32 %v96, %v97
    %v99 = vrot.slane %v98, 2
    %v100 = vmax.f32 %v98, %v99
    %v101 = vrot.slane %v100, 1
    %v102 = vmax.f32 %v100, %v101
    %s103 = vtos %v102
    %v104 = vstv %s103
    %v105 = vmax.f32 %v33, %v104
    %v106 = vsub.f32 %v33, %v105
    %v107 = vmul.f32 %v106, 1.442695
    %v108 = vpow.pop %v107
    %v109 = vmul.f32 %v34, %v108
    %v111 = vlaneseq
    %v112 = vshrl.u32 %v111, 7
    %v113 = vsub.s32 0, %v112
    %v114 = vrot.slane %v105, %v113
    %115 = vset.pattern.permute.xlu0 0
    %116 = vperm.xlu0 %115, %v114
    %v117 = vpop.permute.xlu0 %116
    %v119 = vsub.f32 %v31, %v117
    %v120 = vsub.f32 %v32, %v117
    %v121 = vmul.f32 %v119, 1.442695
    %v122 = vpow.pop %v121
    %v123 = vmul.f32 %v120, 1.442695
    %v124 = vpow.pop %v123
    %v127 = vcombine.high %v122, %v122
    %v129 = vunpack.c.l.s4 1983009808
    %v130 = vunpack.c.0.s8 %v129
    %v131 = vlaneseq
    %v132 = vshrl.u32 %v131, 7
    %v133 = vsub.s32 %v130, %v132
    %v134 = vrot.slane %v122, %v133
    %v136 = vunpack.c.l.s4 1983009808
    %v137 = vunpack.c.0.s8 %v136
    %v138 = vlaneseq
    %v139 = vshrl.u32 %v138, 7
    %v140 = vsub.s32 %v137, %v139
    %v141 = vrot.slane %v127, %v140
    %v142 = vcombine.high %v134, %v134
    %v143 = vcombine.high %v141, %v141
    %v144 = vcombine.high %v124, %v124
    %v146 = vunpack.c.l.s4 1983009808
    %v147 = vunpack.c.0.s8 %v146
    %v148 = vlaneseq
    %v149 = vshrl.u32 %v148, 7
    %v150 = vsub.s32 %v147, %v149
    %v151 = vrot.slane %v124, %v150
    %v153 = vunpack.c.l.s4 1983009808
    %v154 = vunpack.c.0.s8 %v153
    %v155 = vlaneseq
    %v156 = vshrl.u32 %v155, 7
    %v157 = vsub.s32 %v154, %v156
    %v158 = vrot.slane %v144, %v157
    %v159 = vcombine.high %v151, %v151
    %v160 = vcombine.high %v158, %v158
    %v169 = vsel %vm79, %v134, 0.0
    %v170 = vsel %vm79, %v142, 0.0
    %v171 = vadd.f32 %v169, %v170
    %v172 = vsel %vm79, %v141, 0.0
    %v173 = vadd.f32 %v171, %v172
    %v174 = vsel %vm79, %v143, 0.0
    %v175 = vadd.f32 %v173, %v174
    %v176 = vsel %vm79, %v151, 0.0
    %v177 = vadd.f32 %v175, %v176
    %v178 = vsel %vm79, %v159, 0.0
    %v179 = vadd.f32 %v177, %v178
    %v180 = vsel %vm79, %v158, 0.0
    %v181 = vadd.f32 %v179, %v180
    %v182 = vsel %vm79, %v160, 0.0
    %v183 = vadd.f32 %v181, %v182
    %184 = vadd.xlane.f32.xlu0 %v183
    %v185 = vpop.xlane.xlu0 %184
    %v186 = vrot.slane %v185, 4
    %v187 = vadd.f32 %v185, %v186
    %v188 = vrot.slane %v187, 2
    %v189 = vadd.f32 %v187, %v188
    %v190 = vrot.slane %v189, 1
    %v191 = vadd.f32 %v189, %v190
    %s192 = vtos %v191
    %v193 = vstv %s192
    %v194 = vadd.f32 %v109, %v193
    %vm195 = vcmask 0
    %196 = vst.msk [vmem:[#allocation2] sm:$0x1] %vm195, %v105
    %197 = vst.msk [vmem:[#allocation3] sm:$0x1] %vm195, %v194
    // Predicated region
    $region14: #{tpu_custom_call.1} parent=1 // pred_check
      %p198 = pneg %p24
    $region15: #{tpu_custom_call.1} parent=1 // pred_check_branch
      %200 = sbr.rel (%p198) target = $region17
    $region16: #{tpu_custom_call.1} parent=1 // pred_region
      %v201 = vld [vmem:[#allocation2] sm:$0x1]
      %202 = vst.msk [vmem:[#allocation7] sm:$0x1] %vm195, %v201
      %v203 = vld [vmem:[#allocation3] sm:$0x1]
      %204 = vst.msk [vmem:[#allocation8] sm:$0x1] %vm195, %v203
    $region17: #{tpu_custom_call.1} parent=1 // pred_fallthru
      _
    // Predicated region
    $region18: #{tpu_custom_call.1} parent=1 // pred_check
      _
    $region19: #{tpu_custom_call.1} parent=1 // pred_check_branch
      %206 = sbr.rel (0) target = $region21
    $region20: #{tpu_custom_call.1} parent=1 // pred_region
      %s208 = ssub.s32 16, 16
      %209 = vsyncadd [#allocation6], %s208
      %s211 = sshll.u32 [#allocation7], 4
      %s212 = int_to_ptr.vmem [resolvable:$true] %s211
      %214 = dma.vmem_to_hbm [thread:$0]  %s212, 16, %s1, [#allocation6]
    $region21: #{tpu_custom_call.1} parent=1 // pred_fallthru
      _
    // Predicated region
    $region22: #{tpu_custom_call.1} parent=1 // pred_check
      _
    $region23: #{tpu_custom_call.1} parent=1 // pred_check_branch
      %216 = sbr.rel (0) target = $region25
    $region24: #{tpu_custom_call.1} parent=1 // pred_region
      %s218 = ssub.s32 16, 16
      %219 = vsyncadd [#allocation9], %s218
      %s221 = sshll.u32 [#allocation8], 4
      %s222 = int_to_ptr.vmem [resolvable:$true] %s221
      %224 = dma.vmem_to_hbm [thread:$0]  %s222, 16, %s2, [#allocation9]
    $region25: #{tpu_custom_call.1} parent=1 // pred_fallthru
      _
    // Predicated region
    $region26: #{tpu_custom_call.1} parent=1 // pred_check
      _
    $region27: #{tpu_custom_call.1} parent=1 // pred_check_branch
      %226 = sbr.rel (0) target = $region29
    $region28: #{tpu_custom_call.1} parent=1 // pred_region
      %227 = dma.done [#allocation6], 16
    $region29: #{tpu_custom_call.1} parent=1 // pred_fallthru
      _
    // Predicated region
    $region30: #{tpu_custom_call.1} parent=1 // pred_check
      _
    $region31: #{tpu_custom_call.1} parent=1 // pred_check_branch
      %229 = sbr.rel (0) target = $region33
    $region32: #{tpu_custom_call.1} parent=1 // pred_region
      %230 = dma.done [#allocation9], 16
    $region33: #{tpu_custom_call.1} parent=1 // pred_fallthru
      _
    %231 = vsyncpa [#allocation5], 1
    %232 = vsyncpa [#allocation6], 1
    %233 = vsyncpa [#allocation9], 1

</llo_original>
